<compile_context>
chip_gen: v7x
topology: tpu7x:2x2x1
jax: 0.10.0
libtpu: 0.0.40
codegen_flags: <defaults>
</compile_context>

<pallas_src>
import jax
import jax.numpy as jnp
from jax.experimental import pallas as pl
from jax.experimental.pallas import tpu as pltpu


# ---------------------------------------------------------------------------
# Kernel
# ---------------------------------------------------------------------------
def pos_enc_kernel(x_ref, pe_ref, o_ref):
    # x_ref : (bt, ts, D)  activation tile
    # pe_ref: (ts, D)      positional-encoding tile (broadcast over batch tile)
    # o_ref : (bt, ts, D)
    o_ref[...] = x_ref[...] + pe_ref[...]


# ---------------------------------------------------------------------------
# Host-side helpers
# ---------------------------------------------------------------------------
def make_positional_encoding_table(max_len, d_model, dtype=jnp.float32):
    """Build pe[max_len, d_model] exactly like the PyTorch module."""
    assert d_model % 2 == 0, "d_model must be even (and lane-friendly)"
    pos = jnp.arange(max_len, dtype=jnp.float32)[:, None]             # [L, 1]
    idx = jnp.arange(0, d_model, 2, dtype=jnp.float32)                # [D/2]
    div_term = pos / jnp.power(10000.0, idx / d_model)                # [L, D/2]
    pe = jnp.zeros((max_len, d_model), jnp.float32)
    pe = pe.at[:, 0::2].set(jnp.sin(div_term))
    pe = pe.at[:, 1::2].set(jnp.cos(div_term))
    return pe.astype(dtype)


def _sublane_multiple(dtype):
    """Sublane packing factor: 8 for 32-bit, 16 for bf16/f16, 32 for 8-bit."""
    bits = jnp.dtype(dtype).itemsize * 8
    return max(8, 256 // bits)


def _vmem_budget_bytes():
    """Generation-aware scoped-VMEM budget with >=25% headroom."""
    try:
        cap = pltpu.get_tpu_info().vmem_capacity_bytes
    except Exception:
        cap = 64 * 1024 * 1024          # conservative (v7x) fallback
    return int(cap * 3 // 4)            # 48 MiB on v7x, 96 MiB on v5e/v6e


def _divisor_tiles(n, multiple):
    """Divisors of n that are multiples of `multiple`, plus n itself (full dim)."""
    cands = {n}
    d = multiple
    while d < n:
        if n % d == 0:
            cands.add(d)
        d += multiple
    return sorted(cands)


def _pick_tiles(B, S, D, dtype, vmem_budget):
    """Pick (batch_tile, seq_tile) so each x/out block is ~1-4 MiB.

    Small pipelined blocks (512-1024 f32 rows) already hit ~85% of the HBM
    roofline for a streaming add; one giant block would serialize
    read -> add -> write and leave a v7x TensorCore idle.
    """
    itemsize = jnp.dtype(dtype).itemsize
    sub = _sublane_multiple(dtype)
    row_bytes = D * itemsize

    target_block = 2 * 1024 * 1024                    # ~2 MiB per x block
    max_block = max(target_block, vmem_budget // 6)   # keep 2x(x+out)+pe well under budget

    def block_bytes(bt, ts):
        return bt * ts * row_bytes

    # Seq tile: largest sublane-aligned divisor of S whose block fits the
    # target; otherwise the smallest candidate (S itself always legal).
    ts_cands = _divisor_tiles(S, sub)
    ts = ts_cands[0]
    for c in ts_cands:
        if block_bytes(B, c) <= target_block:
            ts = c

    # Batch tile: only shrink below B if even the smallest seq tile is too big
    # (very large B*D) -- keeps blocks bounded and adds parallel grid steps.
    bt = 1
    for c in _divisor_tiles(B, 1):
        if block_bytes(c, ts) <= max_block:
            bt = c
    return bt, ts


# ---------------------------------------------------------------------------
# Wrapper
# ---------------------------------------------------------------------------
def positional_encoding(x, pe, *, tile_batch=None, tile_seq=None,
                        force_pallas=False):
    """x: [B, S, d_model], pe: [max_len, d_model] -> [B, S, d_model]."""
    B, S, D = x.shape
    assert pe.shape[0] >= S and pe.shape[1] == D

    # Host-side slice + cast: pe travels at activation width, no in-kernel convert.
    pe_s = pe[:S, :].astype(x.dtype)

    itemsize = jnp.dtype(x.dtype).itemsize
    total_bytes = B * S * D * itemsize

    # Tiny problems: custom-call overhead dominates a one-add-per-element op
    # and blocks XLA fusion -- just do the broadcast add in plain JAX.
    if not force_pallas and total_bytes < (1 << 20):
        return x + pe_s[None, :, :]

    vmem_budget = _vmem_budget_bytes()
    bt, ts = _pick_tiles(B, S, D, x.dtype, vmem_budget)
    if tile_batch is not None:
        bt = tile_batch
    if tile_seq is not None:
        ts = tile_seq
    assert B % bt == 0 and S % ts == 0, "tiles must divide (B, S)"

    grid = (B // bt, S // ts)

    # Only raise the scoped-VMEM limit if the (double-buffered) blocks need
    # more than the 32 MiB default; never exceed the generation-aware budget.
    block_bytes = bt * ts * D * itemsize
    need = 2 * (2 * block_bytes + ts * D * itemsize) + (4 << 20)  # + compiler headroom
    vmem_limit = int(min(vmem_budget, need)) if need > (32 << 20) else None

    cost = pl.CostEstimate(
        flops=B * S * D,                                    # one add per element
        transcendentals=0,
        bytes_accessed=(2 * B * S * D + S * D) * itemsize,  # read x + pe, write out
    )

    out = pl.pallas_call(
        pos_enc_kernel,
        out_shape=jax.ShapeDtypeStruct((B, S, D), x.dtype),
        grid_spec=pltpu.PrefetchScalarGridSpec(
            num_scalar_prefetch=0,
            grid=grid,
            in_specs=[
                pl.BlockSpec((bt, ts, D), lambda b, s: (b, s, 0)),  # x tile
                pl.BlockSpec((ts, D), lambda b, s: (s, 0)),         # pe tile
            ],
            out_specs=pl.BlockSpec((bt, ts, D), lambda b, s: (b, s, 0)),
        ),
        compiler_params=pltpu.CompilerParams(
            dimension_semantics=("parallel", "parallel"),
            vmem_limit_bytes=vmem_limit,
        ),
        cost_estimate=cost,
        input_output_aliases={0: 0},   # out aliases x (op is x += pe)
    )(x, pe_s)
    return out


# ---------------------------------------------------------------------------
# Test
# ---------------------------------------------------------------------------
if __name__ == "__main__":
    # Small shapes consistent with the module's forward: x: [batch, seq, d_model]
    batch, seq, d_model, max_len = 2, 16, 128, 64

    key = jax.random.PRNGKey(0)
    x = jax.random.normal(key, (batch, seq, d_model), jnp.float32)
    pe = make_positional_encoding_table(max_len, d_model, dtype=jnp.float32)

    # Pure-JAX reference (dropout is identity in eval mode).
    ref = x + pe[None, :seq, :]

    # 1) Pallas path (forced, since the test shape is below the tiny-problem cutoff).
    out = positional_encoding(x, pe, force_pallas=True)
    out = jax.block_until_ready(out)
    assert out.shape == (batch, seq, d_model)
    assert jnp.allclose(out, ref, atol=1e-6, rtol=1e-6)

    # 2) Default path (tiny-shape fallback) must agree as well.
    out_fb = jax.block_until_ready(positional_encoding(x, pe))
    assert jnp.allclose(out_fb, ref, atol=1e-6, rtol=1e-6)

    # 3) bf16 activations exercise the host-side pe cast + sublane-16 tiling.
    x_bf = x.astype(jnp.bfloat16)
    out_bf = jax.block_until_ready(positional_encoding(x_bf, pe, force_pallas=True))
    ref_bf = x_bf + pe[None, :seq, :].astype(jnp.bfloat16)
    assert jnp.allclose(out_bf.astype(jnp.float32), ref_bf.astype(jnp.float32),
                        atol=1e-2, rtol=1e-2)

    print("KERNEL_OK")
</pallas_src>

<mosaic_0001>
module attributes {stable_mosaic.version = 11 : i64} {
  func.func @pos_enc_kernel(%arg0: i32, %arg1: i32, %arg2: memref<2x16x128xf32, #tpu.memory_space<vmem>>, %arg3: memref<16x128xf32, #tpu.memory_space<vmem>>, %arg4: memref<2x16x128xf32, #tpu.memory_space<vmem>>) attributes {dimension_semantics = [#tpu.dimension_semantics<parallel>, #tpu.dimension_semantics<parallel>], iteration_bounds = array<i64: 1, 1>, scalar_prefetch = 0 : i64, scratch_operands = 0 : i64, tpu.core_type = #tpu.core_type<tc>, window_params = [{transform_indices = @transform_0, window_bounds = array<i64: 2, 16, 128>}, {transform_indices = @transform_1, window_bounds = array<i64: 16, 128>}, {transform_indices = @transform_2, window_bounds = array<i64: 2, 16, 128>}]} {
    %c0 = arith.constant 0 : index
    %c0_0 = arith.constant 0 : index
    %c0_1 = arith.constant 0 : index
    %0 = vector.load %arg2[%c0, %c0_0, %c0_1] : memref<2x16x128xf32, #tpu.memory_space<vmem>>, vector<2x16x128xf32>
    %c0_2 = arith.constant 0 : index
    %c0_3 = arith.constant 0 : index
    %1 = vector.load %arg3[%c0_2, %c0_3] : memref<16x128xf32, #tpu.memory_space<vmem>>, vector<16x128xf32>
    %2 = vector.shape_cast %1 : vector<16x128xf32> to vector<1x16x128xf32>
    %3 = vector.broadcast %2 : vector<1x16x128xf32> to vector<2x16x128xf32>
    %4 = arith.addf %0, %3 : vector<2x16x128xf32>
    %c0_4 = arith.constant 0 : index
    %c0_5 = arith.constant 0 : index
    %c0_6 = arith.constant 0 : index
    %5 = vector.load %arg4[%c0_4, %c0_5, %c0_6] : memref<2x16x128xf32, #tpu.memory_space<vmem>>, vector<2x16x128xf32>
    tpu.vector_store %arg4[%c0_4, %c0_5, %c0_6], %4 {strides = array<i32>} : memref<2x16x128xf32, #tpu.memory_space<vmem>>, vector<2x16x128xf32>,
    return
  }
  func.func @transform_0(%arg0: i32, %arg1: i32) -> (i32, i32, i32) {
    %c0_i32 = arith.constant 0 : i32
    %c0_i32_0 = arith.constant 0 : i32
    return %arg0, %arg1, %c0_i32 : i32, i32, i32
  }
  func.func @transform_1(%arg0: i32, %arg1: i32) -> (i32, i32) {
    %c0_i32 = arith.constant 0 : i32
    %c0_i32_0 = arith.constant 0 : i32
    return %arg1, %c0_i32 : i32, i32
  }
  func.func @transform_2(%arg0: i32, %arg1: i32) -> (i32, i32, i32) {
    %c0_i32 = arith.constant 0 : i32
    %c0_i32_0 = arith.constant 0 : i32
    return %arg0, %arg1, %c0_i32 : i32, i32, i32
  }
}

</mosaic_0001>

<llo_original>
// kernel: tpu_custom_call.1
$region0: #{tpu_custom_call.1}
  #allocation0 [shape = 'u32[]', space=smem, size = 0x4, offset = 0x4, fixed_abs, tag = 'smem constant byte address 0x4 - core index']
  #allocation1 [shape = 'u32[144,128]{1,0:T(1,128)}', space=vmem, size = 0x12000, scoped, tag = 'internal scratch']
  %s0 = inlined_call_operand.hbm [shape: f32[2,16,128], index: 0, kind: input, shape index: {}, may-alias: {0,2}]
  %s1 = inlined_call_operand.vmem [shape: f32[16,128], index: 1, kind: input, shape index: {}]
  %s2 = inlined_call_operand.hbm [shape: f32[2,16,128], index: 2, kind: output, shape index: {}, may-alias: {0,2}]
  %s3 = sld [smem:[#allocation0]]
  $region22: #{tpu_custom_call.1} parent=0
    _
  %s5 = ssub.s32 1, %s3
  %s6 = scalar_select 0, %s5, %s3
  $region1: #{tpu_custom_call.1} parent=0
    #allocation2 [shape = 'u8[16384]{0}', space=vmem, size = 0x4000, scoped, tag = 'input window, operand 0, single buffered']
    #allocation3 [shape = 's32[1]{0}', space=sflag, size = 0x4, scoped, tag = 'scoped memory for tpu_custom_call.1']
    #allocation4 [shape = 's32[1]{0}', space=sflag, size = 0x4, scoped, tag = 'scoped memory for tpu_custom_call.1']
    #allocation5 [shape = 'u8[16384]{0}', space=vmem, size = 0x4000, scoped, tag = 'output window, operand 0, single buffered']
    %7 = vsyncpa [#allocation3], 0
    %8 = vsyncpa [#allocation4], 0
    // Predicated region
    $region2: #{tpu_custom_call.1} parent=1 // pred_check
      _
    $region3: #{tpu_custom_call.1} parent=1 // pred_check_branch
      %10 = sbr.rel (0) target = $region5
    $region4: #{tpu_custom_call.1} parent=1 // pred_region
      %s12 = ssub.s32 512, 512
      %13 = vsyncadd [#allocation3], %s12
      %s14 = sshll.u32 [#allocation2], 4
      %s15 = int_to_ptr.vmem [resolvable:$true] %s14
      %20 = dma.hbm_to_vmem [thread:$0]  %s0, 512, %s15, [#allocation3], 128, 128, 8
    $region5: #{tpu_custom_call.1} parent=1 // pred_fallthru
      _
    // Predicated region
    $region6: #{tpu_custom_call.1} parent=1 // pred_check
      _
    $region7: #{tpu_custom_call.1} parent=1 // pred_check_branch
      %22 = sbr.rel (0) target = $region9
    $region8: #{tpu_custom_call.1} parent=1 // pred_region
      _
    $region9: #{tpu_custom_call.1} parent=1 // pred_fallthru
      _
    // Predicated region
    $region10: #{tpu_custom_call.1} parent=1 // pred_check
      _
    $region11: #{tpu_custom_call.1} parent=1 // pred_check_branch
      %24 = sbr.rel (0) target = $region13
    $region12: #{tpu_custom_call.1} parent=1 // pred_region
      %25 = dma.done [#allocation3], 512
    $region13: #{tpu_custom_call.1} parent=1 // pred_fallthru
      _
    %v26 = vld [vmem:[#allocation2] sm:$0xff]
    %v27 = vld [vmem:[#allocation2 + $0x8] sm:$0xff]
    %v28 = vld [vmem:[#allocation2 + $0x10] sm:$0xff]
    %v29 = vld [vmem:[#allocation2 + $0x18] sm:$0xff]
    %v30 = vld [vmem:[%s1] sm:$0xff]
    %v31 = vld [vmem:[%s1 + $0x8] sm:$0xff]
    %v32 = vadd.f32 %v26, %v30
    %v33 = vadd.f32 %v27, %v31
    %v34 = vadd.f32 %v28, %v30
    %v35 = vadd.f32 %v29, %v31
    %36 = vst [vmem:[#allocation5] sm:$0xff] %v32
    %37 = vst [vmem:[#allocation5 + $0x8] sm:$0xff] %v33
    %38 = vst [vmem:[#allocation5 + $0x10] sm:$0xff] %v34
    %39 = vst [vmem:[#allocation5 + $0x18] sm:$0xff] %v35
    // Predicated region
    $region14: #{tpu_custom_call.1} parent=1 // pred_check
      _
    $region15: #{tpu_custom_call.1} parent=1 // pred_check_branch
      %41 = sbr.rel (0) target = $region17
    $region16: #{tpu_custom_call.1} parent=1 // pred_region
      %s43 = ssub.s32 512, 512
      %44 = vsyncadd [#allocation4], %s43
      %s45 = sshll.u32 [#allocation5], 4
      %s46 = int_to_ptr.vmem [resolvable:$true] %s45
      %51 = dma.vmem_to_hbm [thread:$0]  %s46, 512, %s2, [#allocation4], 128, 128, 8
    $region17: #{tpu_custom_call.1} parent=1 // pred_fallthru
      _
    // Predicated region
    $region18: #{tpu_custom_call.1} parent=1 // pred_check
      _
    $region19: #{tpu_custom_call.1} parent=1 // pred_check_branch
      %53 = sbr.rel (0) target = $region21
    $region20: #{tpu_custom_call.1} parent=1 // pred_region
      %54 = dma.done [#allocation4], 512
    $region21: #{tpu_custom_call.1} parent=1 // pred_fallthru
      _
    %55 = vsyncpa [#allocation3], 1
    %56 = vsyncpa [#allocation4], 1

</llo_original>
